<compile_context>
chip_gen: v7x
topology: tpu7x:2x2x1
jax: 0.10.0
libtpu: 0.0.40
codegen_flags: <defaults>
</compile_context>

<pallas_src>
import math
import functools

import jax
import jax.numpy as jnp
from jax.experimental import pallas as pl
from jax.experimental.pallas import tpu as pltpu


# ----------------------------------------------------------------------------
# Helpers
# ----------------------------------------------------------------------------
def _pick_tile(dim, preferred):
    """Largest preferred tile that divides `dim`, else the full dim."""
    for t in preferred:
        if t <= dim and dim % t == 0:
            return t
    return dim


def _cparams(*semantics, **kw):
    """TPU compiler params (skipped when the backend is not TPU)."""
    if jax.default_backend() != "tpu":
        return None
    return pltpu.CompilerParams(dimension_semantics=tuple(semantics), **kw)


def make_positional_encoding(max_len: int, d_model: int, dtype=jnp.float32):
    """pe buffer exactly as PositionalEncoding.__init__ builds it: [L, 1, D]."""
    position = jnp.arange(max_len, dtype=jnp.float32)[:, None]
    div_term = jnp.exp(
        jnp.arange(0, d_model, 2, dtype=jnp.float32)
        * (-math.log(10000.0) / d_model)
    )
    ang = position * div_term
    pe = jnp.zeros((max_len, 1, d_model), dtype=dtype)
    pe = pe.at[:, 0, 0::2].set(jnp.sin(ang).astype(dtype))
    pe = pe.at[:, 0, 1::2].set(jnp.cos(ang).astype(dtype))
    return pe


# ----------------------------------------------------------------------------
# Kernel 1: fused embedding-sum * sqrt(d_model) + positional encoding
#   inputs  : 5 embeddings [B, S, D], pe_slice [S, D]
#   layout  : batch-major so trailing (ts, 128) blocks fill whole vregs
# ----------------------------------------------------------------------------
def _embed_scale_pe_kernel(e0_ref, e1_ref, e2_ref, e3_ref, e4_ref,
                           pe_ref, o_ref, *, scale):
    s = (e0_ref[...] + e1_ref[...] + e2_ref[...] + e3_ref[...] + e4_ref[...])
    o_ref[...] = (s * scale + pe_ref[...]).astype(o_ref.dtype)


def pallas_embed_scale_pe(embs, pe_slice, d_model):
    B, S, D = embs[0].shape
    ts = _pick_tile(S, (512, 256, 128, 64, 32, 16, 8))
    emb_spec = pl.BlockSpec((1, ts, D), lambda b, i: (b, i, 0))
    pe_spec = pl.BlockSpec((ts, D), lambda b, i: (i, 0))
    kernel = functools.partial(_embed_scale_pe_kernel,
                               scale=float(math.sqrt(d_model)))
    return pl.pallas_call(
        kernel,
        out_shape=jax.ShapeDtypeStruct((B, S, D), jnp.float32),
        grid=(B, S // ts),
        in_specs=[emb_spec] * 5 + [pe_spec],
        out_specs=pl.BlockSpec((1, ts, D), lambda b, i: (b, i, 0)),
        compiler_params=_cparams("parallel", "parallel"),
    )(*embs, pe_slice)


# ----------------------------------------------------------------------------
# Kernel 2: fused (LayerNorm) + matmul + bias / ReLU / residual epilogue
#   K always fits one tile in this model (128 / 256), so there is no K grid
#   axis and no accumulator scratch.  MXU runs bf16; epilogue stays f32.
# ----------------------------------------------------------------------------
def _matmul_kernel(a_ref, b_ref, *rest, has_ln, has_bias, has_res,
                   activation, ln_eps):
    idx = 0
    if has_ln:
        g_ref, bb_ref = rest[idx], rest[idx + 1]
        idx += 2
        x = a_ref[...].astype(jnp.float32)
        mu = jnp.mean(x, axis=-1, keepdims=True)
        xc = x - mu
        var = jnp.mean(xc * xc, axis=-1, keepdims=True)
        a = (xc * jax.lax.rsqrt(var + ln_eps)
             * g_ref[...].astype(jnp.float32)
             + bb_ref[...].astype(jnp.float32)).astype(jnp.bfloat16)
    else:
        a = a_ref[...].astype(jnp.bfloat16)

    bias_ref = None
    if has_bias:
        bias_ref = rest[idx]
        idx += 1
    res_ref = None
    if has_res:
        res_ref = rest[idx]
        idx += 1
    o_ref = rest[idx]

    out = jnp.dot(a, b_ref[...].astype(jnp.bfloat16),
                  preferred_element_type=jnp.float32)
    if has_bias:
        out = out + bias_ref[...].astype(jnp.float32)
    if activation == "relu":
        out = jnp.maximum(out, 0.0)
    if has_res:
        out = out + res_ref[...].astype(jnp.float32)
    o_ref[...] = out.astype(o_ref.dtype)


def pallas_matmul(a, b, bias=None, residual=None, activation=None, ln=None,
                  out_dtype=jnp.float32, ln_eps=1e-5):
    """a: [M,K], b: [K,N], bias: [1,N], residual: [M,N], ln: (gamma, beta) [1,K]."""
    M, K = a.shape
    K2, N = b.shape
    assert K == K2
    # TODO(synk): pad non-128-multiple N / K instead of asserting.
    assert K % 128 == 0 and N % 128 == 0, (K, N)
    assert M % 8 == 0, M

    tm = _pick_tile(M, (512, 256, 128, 64, 32, 16, 8))
    # give both v7x TensorCores work along the parallel M axis when possible
    if M // tm < 2 and tm % 16 == 0 and tm >= 32:
        tm //= 2
    tn = _pick_tile(N, (512, 384, 256, 128))   # 256-multiples preferred (v6e MXU)
    grid = (M // tm, N // tn)

    in_specs = [pl.BlockSpec((tm, K), lambda i, j: (i, 0)),
                pl.BlockSpec((K, tn), lambda i, j: (0, j))]
    args = [a, b]
    if ln is not None:
        gamma, beta = ln
        in_specs += [pl.BlockSpec((1, K), lambda i, j: (0, 0)),
                     pl.BlockSpec((1, K), lambda i, j: (0, 0))]
        args += [gamma, beta]
    if bias is not None:
        in_specs.append(pl.BlockSpec((1, tn), lambda i, j: (0, j)))
        args.append(bias)
    if residual is not None:
        in_specs.append(pl.BlockSpec((tm, tn), lambda i, j: (i, j)))
        args.append(residual)

    kernel = functools.partial(_matmul_kernel,
                               has_ln=ln is not None,
                               has_bias=bias is not None,
                               has_res=residual is not None,
                               activation=activation,
                               ln_eps=ln_eps)
    return pl.pallas_call(
        kernel,
        out_shape=jax.ShapeDtypeStruct((M, N), out_dtype),
        grid=grid,
        in_specs=in_specs,
        out_specs=pl.BlockSpec((tm, tn), lambda i, j: (i, j)),
        compiler_params=_cparams("parallel", "parallel"),
    )(*args)


# ----------------------------------------------------------------------------
# Kernel 3: causal multi-head self-attention, lane-dense [B, S, D] layout.
#   q/k/v come from the packed qkv buffer via column-offset BlockSpecs,
#   heads are handled in-kernel by slicing the lane dimension.
# ----------------------------------------------------------------------------
def _mha_kernel(q_ref, k_ref, v_ref, o_ref, *, nhead, scale):
    q = q_ref[0]                                    # (S, D) bf16
    k = k_ref[0]
    v = v_ref[0]
    S, D = q.shape
    dh = D // nhead
    row = jax.lax.broadcasted_iota(jnp.int32, (S, S), 0)
    col = jax.lax.broadcasted_iota(jnp.int32, (S, S), 1)
    causal = col > row                              # square subsequent mask
    for h in range(nhead):
        lo, hi = h * dh, (h + 1) * dh
        qh = q[:, lo:hi]
        kh = k[:, lo:hi]
        vh = v[:, lo:hi]
        # "nt" contraction: no explicit k transpose inside the kernel.
        s = jax.lax.dot_general(qh, kh, (((1,), (1,)), ((), ())),
                                preferred_element_type=jnp.float32) * scale
        s = jnp.where(causal, -jnp.inf, s)
        m = jnp.max(s, axis=-1, keepdims=True)
        p = jnp.exp(s - m)
        inv = pl.reciprocal(jnp.sum(p, axis=-1, keepdims=True), approx=True)
        p = (p * inv).astype(jnp.bfloat16)
        oh = jnp.dot(p, vh, preferred_element_type=jnp.float32)
        o_ref[0, :, lo:hi] = oh.astype(o_ref.dtype)


def pallas_causal_attention(qkv, nhead):
    """qkv: [B, S, 3*D] (packed q|k|v along last axis) -> [B, S, D]."""
    B, S, threeD = qkv.shape
    D = threeD // 3
    assert D % nhead == 0
    q_spec = pl.BlockSpec((1, S, D), lambda b: (b, 0, 0))
    k_spec = pl.BlockSpec((1, S, D), lambda b: (b, 0, 1))
    v_spec = pl.BlockSpec((1, S, D), lambda b: (b, 0, 2))
    kernel = functools.partial(_mha_kernel, nhead=nhead,
                               scale=1.0 / math.sqrt(D // nhead))
    return pl.pallas_call(
        kernel,
        out_shape=jax.ShapeDtypeStruct((B, S, D), jnp.bfloat16),
        grid=(B,),
        in_specs=[q_spec, k_spec, v_spec],
        out_specs=pl.BlockSpec((1, S, D), lambda b: (b, 0, 0)),
        compiler_params=_cparams("parallel"),
    )(qkv, qkv, qkv)


# ----------------------------------------------------------------------------
# Parameters (mirrors TransformerModel.__init__ / init_weights)
# ----------------------------------------------------------------------------
def init_params(key, *, ntoken, d_model, nhead, d_hid, nlayers,
                nplayers=2, npieces=6, npositions=64, initrange=0.1):
    def uni(k, shape):
        return jax.random.uniform(k, shape, jnp.float32, -initrange, initrange)

    keys = jax.random.split(key, 6 + nlayers)
    params = {
        "emb": uni(keys[0], (ntoken, d_model)),
        "player_emb": uni(keys[1], (nplayers + 1, d_model)),
        "piece_emb": uni(keys[2], (npieces + 1, d_model)),
        "position_emb": uni(keys[3], (npositions + 1, d_model)),
        "w_out": uni(keys[4], (d_model, ntoken)),
        "b_out": jnp.zeros((1, ntoken), jnp.float32),
        "layers": [],
    }
    for li in range(nlayers):
        lk = jax.random.split(keys[5 + li], 8)
        params["layers"].append({
            "ln1_g": jnp.ones((1, d_model), jnp.float32),
            "ln1_b": jnp.zeros((1, d_model), jnp.float32),
            "ln2_g": jnp.ones((1, d_model), jnp.float32),
            "ln2_b": jnp.zeros((1, d_model), jnp.float32),
            "w_qkv": uni(lk[0], (d_model, 3 * d_model)),
            "b_qkv": uni(lk[1], (1, 3 * d_model)),
            "w_o": uni(lk[2], (d_model, d_model)),
            "b_o": uni(lk[3], (1, d_model)),
            "w_1": uni(lk[4], (d_model, d_hid)),
            "b_1": uni(lk[5], (1, d_hid)),
            "w_2": uni(lk[6], (d_hid, d_model)),
            "b_2": uni(lk[7], (1, d_model)),
        })
    return params


# ----------------------------------------------------------------------------
# Full forward (TransformerModel.forward, eval mode)
# ----------------------------------------------------------------------------
def transformer_forward(params, pe, src, players, pieces, start_pos, end_pos,
                        *, d_model, nhead):
    S, B = src.shape
    D = d_model
    assert S <= pe.shape[0], "sequence longer than positional-encoding buffer"

    # Batch-major index arrays -> [B, S, D] embeddings (free reshapes later).
    idxs = [t.T for t in (src, players, pieces, start_pos, end_pos)]
    tables = [params["emb"], params["player_emb"], params["piece_emb"],
              params["position_emb"], params["position_emb"]]
    embs = [jnp.take(tab, idx, axis=0) for tab, idx in zip(tables, idxs)]
    pe_slice = pe[:S, 0, :]                                   # [S, D]

    x = pallas_embed_scale_pe(embs, pe_slice, D)              # [B, S, D] f32
    M = B * S
    x2 = x.reshape(M, D)                                      # residual stream, f32

    for lp in params["layers"]:
        # --- self-attention block (pre-norm; LN fused into QKV projection) ---
        qkv = pallas_matmul(x2, lp["w_qkv"], bias=lp["b_qkv"],
                            ln=(lp["ln1_g"], lp["ln1_b"]),
                            out_dtype=jnp.bfloat16)           # [M, 3D] bf16
        attn = pallas_causal_attention(qkv.reshape(B, S, 3 * D), nhead)
        # out-projection with fused bias + residual add (f32 epilogue)
        x2 = pallas_matmul(attn.reshape(M, D), lp["w_o"], bias=lp["b_o"],
                           residual=x2, out_dtype=jnp.float32)

        # --- feed-forward block (pre-norm; LN fused into linear1) ---
        h = pallas_matmul(x2, lp["w_1"], bias=lp["b_1"],
                          ln=(lp["ln2_g"], lp["ln2_b"]),
                          activation="relu", out_dtype=jnp.bfloat16)
        x2 = pallas_matmul(h, lp["w_2"], bias=lp["b_2"],
                           residual=x2, out_dtype=jnp.float32)

    logits = pallas_matmul(x2, params["w_out"], bias=params["b_out"],
                           out_dtype=jnp.float32)             # [M, ntoken]
    # restore the PyTorch [S, B, ntoken] layout with a single final transpose
    return logits.reshape(B, S, -1).transpose(1, 0, 2)


# ----------------------------------------------------------------------------
# Pure-JAX f32 reference (same params) for validation
# ----------------------------------------------------------------------------
def _ln_ref(x, g, b, eps=1e-5):
    mu = jnp.mean(x, axis=-1, keepdims=True)
    xc = x - mu
    var = jnp.mean(xc * xc, axis=-1, keepdims=True)
    return xc * jax.lax.rsqrt(var + eps) * g[0] + b[0]


def ref_forward(params, pe, src, players, pieces, start_pos, end_pos,
                *, d_model, nhead):
    S, B = src.shape
    D, H = d_model, nhead
    Dh = D // H
    x = (params["emb"][src] + params["player_emb"][players]
         + params["piece_emb"][pieces] + params["position_emb"][start_pos]
         + params["position_emb"][end_pos])
    x = x * math.sqrt(D) + pe[:S]
    x2 = x.reshape(S * B, D)
    mask = jnp.triu(jnp.full((S, S), -jnp.inf, jnp.float32), k=1)
    for lp in params["layers"]:
        h = _ln_ref(x2, lp["ln1_g"], lp["ln1_b"])
        qkv = h @ lp["w_qkv"] + lp["b_qkv"][0]
        q, k, v = jnp.split(qkv, 3, axis=-1)

        def heads(t):
            return t.reshape(S, B, H, Dh).transpose(1, 2, 0, 3)   # [B,H,S,Dh]

        qh, kh, vh = heads(q), heads(k), heads(v)
        scores = jnp.einsum("bhsd,bhtd->bhst", qh, kh) / math.sqrt(Dh) + mask
        p = jax.nn.softmax(scores, axis=-1)
        attn = jnp.einsum("bhst,bhtd->bhsd", p, vh)
        attn2 = attn.transpose(2, 0, 1, 3).reshape(S * B, D)
        x2 = x2 + (attn2 @ lp["w_o"] + lp["b_o"][0])
        h = _ln_ref(x2, lp["ln2_g"], lp["ln2_b"])
        h = jnp.maximum(h @ lp["w_1"] + lp["b_1"][0], 0.0)
        x2 = x2 + (h @ lp["w_2"] + lp["b_2"][0])
    out = x2 @ params["w_out"] + params["b_out"][0]
    return out.reshape(S, B, -1)


# ----------------------------------------------------------------------------
# Demo / self-test
# ----------------------------------------------------------------------------
if __name__ == "__main__":
    NTOKEN, D_MODEL, NHEAD, D_HID, NLAYERS = 256, 128, 4, 256, 2
    NPLAYERS, NPIECES, NPOSITIONS = 2, 6, 64
    S, B = 8, 2
    MAX_LEN = 64

    root = jax.random.PRNGKey(0)
    kp, kd = jax.random.split(root)
    params = init_params(kp, ntoken=NTOKEN, d_model=D_MODEL, nhead=NHEAD,
                         d_hid=D_HID, nlayers=NLAYERS, nplayers=NPLAYERS,
                         npieces=NPIECES, npositions=NPOSITIONS)
    pe = make_positional_encoding(MAX_LEN, D_MODEL)

    kk = jax.random.split(kd, 5)
    src = jax.random.randint(kk[0], (S, B), 0, NTOKEN)
    players = jax.random.randint(kk[1], (S, B), 0, NPLAYERS + 1)
    pieces = jax.random.randint(kk[2], (S, B), 0, NPIECES + 1)
    start_pos = jax.random.randint(kk[3], (S, B), 0, NPOSITIONS + 1)
    end_pos = jax.random.randint(kk[4], (S, B), 0, NPOSITIONS + 1)

    out = transformer_forward(params, pe, src, players, pieces, start_pos,
                              end_pos, d_model=D_MODEL, nhead=NHEAD)
    out = jax.block_until_ready(out)
    assert out.shape == (S, B, NTOKEN), out.shape
    assert bool(jnp.all(jnp.isfinite(out)))

    ref = ref_forward(params, pe, src, players, pieces, start_pos, end_pos,
                      d_model=D_MODEL, nhead=NHEAD)
    ref = jax.block_until_ready(ref)
    # bf16 MXU path + approx reciprocal vs. a pure-f32 reference.
    assert jnp.allclose(out, ref, atol=1e-1, rtol=1e-1), (
        "mismatch vs reference; max abs err = "
        f"{float(jnp.max(jnp.abs(out - ref)))}")

    print("KERNEL_OK")
</pallas_src>

<mosaic_0001>
module attributes {stable_mosaic.version = 11 : i64} {
  func.func @_embed_scale_pe_kernel(%arg0: i32, %arg1: i32, %arg2: memref<1x8x128xf32, #tpu.memory_space<vmem>>, %arg3: memref<1x8x128xf32, #tpu.memory_space<vmem>>, %arg4: memref<1x8x128xf32, #tpu.memory_space<vmem>>, %arg5: memref<1x8x128xf32, #tpu.memory_space<vmem>>, %arg6: memref<1x8x128xf32, #tpu.memory_space<vmem>>, %arg7: memref<8x128xf32, #tpu.memory_space<vmem>>, %arg8: memref<1x8x128xf32, #tpu.memory_space<vmem>>) attributes {dimension_semantics = [#tpu.dimension_semantics<arbitrary>, #tpu.dimension_semantics<arbitrary>], iteration_bounds = array<i64: 2, 1>, scalar_prefetch = 0 : i64, scratch_operands = 0 : i64, tpu.core_type = #tpu.core_type<tc>, window_params = [{transform_indices = @transform_0, window_bounds = array<i64: 1, 8, 128>}, {transform_indices = @transform_1, window_bounds = array<i64: 1, 8, 128>}, {transform_indices = @transform_2, window_bounds = array<i64: 1, 8, 128>}, {transform_indices = @transform_3, window_bounds = array<i64: 1, 8, 128>}, {transform_indices = @transform_4, window_bounds = array<i64: 1, 8, 128>}, {transform_indices = @transform_5, window_bounds = array<i64: 8, 128>}, {transform_indices = @transform_6, window_bounds = array<i64: 1, 8, 128>}]} {
    %c0 = arith.constant 0 : index
    %c0_0 = arith.constant 0 : index
    %c0_1 = arith.constant 0 : index
    %0 = vector.load %arg2[%c0, %c0_0, %c0_1] : memref<1x8x128xf32, #tpu.memory_space<vmem>>, vector<1x8x128xf32>
    %c0_2 = arith.constant 0 : index
    %c0_3 = arith.constant 0 : index
    %c0_4 = arith.constant 0 : index
    %1 = vector.load %arg3[%c0_2, %c0_3, %c0_4] : memref<1x8x128xf32, #tpu.memory_space<vmem>>, vector<1x8x128xf32>
    %2 = arith.addf %0, %1 : vector<1x8x128xf32>
    %c0_5 = arith.constant 0 : index
    %c0_6 = arith.constant 0 : index
    %c0_7 = arith.constant 0 : index
    %3 = vector.load %arg4[%c0_5, %c0_6, %c0_7] : memref<1x8x128xf32, #tpu.memory_space<vmem>>, vector<1x8x128xf32>
    %4 = arith.addf %2, %3 : vector<1x8x128xf32>
    %c0_8 = arith.constant 0 : index
    %c0_9 = arith.constant 0 : index
    %c0_10 = arith.constant 0 : index
    %5 = vector.load %arg5[%c0_8, %c0_9, %c0_10] : memref<1x8x128xf32, #tpu.memory_space<vmem>>, vector<1x8x128xf32>
    %6 = arith.addf %4, %5 : vector<1x8x128xf32>
    %c0_11 = arith.constant 0 : index
    %c0_12 = arith.constant 0 : index
    %c0_13 = arith.constant 0 : index
    %7 = vector.load %arg6[%c0_11, %c0_12, %c0_13] : memref<1x8x128xf32, #tpu.memory_space<vmem>>, vector<1x8x128xf32>
    %8 = arith.addf %6, %7 : vector<1x8x128xf32>
    %cst = arith.constant 11.3137083 : f32
    %9 = vector.broadcast %cst : f32 to vector<1x8x128xf32>
    %10 = arith.mulf %8, %9 : vector<1x8x128xf32>
    %c0_14 = arith.constant 0 : index
    %c0_15 = arith.constant 0 : index
    %11 = vector.load %arg7[%c0_14, %c0_15] : memref<8x128xf32, #tpu.memory_space<vmem>>, vector<8x128xf32>
    %12 = vector.shape_cast %11 : vector<8x128xf32> to vector<1x8x128xf32>
    %13 = arith.addf %10, %12 : vector<1x8x128xf32>
    %c0_16 = arith.constant 0 : index
    %c0_17 = arith.constant 0 : index
    %c0_18 = arith.constant 0 : index
    %14 = vector.load %arg8[%c0_16, %c0_17, %c0_18] : memref<1x8x128xf32, #tpu.memory_space<vmem>>, vector<1x8x128xf32>
    tpu.vector_store %arg8[%c0_16, %c0_17, %c0_18], %13 {strides = array<i32>} : memref<1x8x128xf32, #tpu.memory_space<vmem>>, vector<1x8x128xf32>,
    return
  }
  func.func @transform_0(%arg0: i32, %arg1: i32) -> (i32, i32, i32) {
    %c0_i32 = arith.constant 0 : i32
    %c0_i32_0 = arith.constant 0 : i32
    return %arg0, %arg1, %c0_i32 : i32, i32, i32
  }
  func.func @transform_1(%arg0: i32, %arg1: i32) -> (i32, i32, i32) {
    %c0_i32 = arith.constant 0 : i32
    %c0_i32_0 = arith.constant 0 : i32
    return %arg0, %arg1, %c0_i32 : i32, i32, i32
  }
  func.func @transform_2(%arg0: i32, %arg1: i32) -> (i32, i32, i32) {
    %c0_i32 = arith.constant 0 : i32
    %c0_i32_0 = arith.constant 0 : i32
    return %arg0, %arg1, %c0_i32 : i32, i32, i32
  }
  func.func @transform_3(%arg0: i32, %arg1: i32) -> (i32, i32, i32) {
    %c0_i32 = arith.constant 0 : i32
    %c0_i32_0 = arith.constant 0 : i32
    return %arg0, %arg1, %c0_i32 : i32, i32, i32
  }
  func.func @transform_4(%arg0: i32, %arg1: i32) -> (i32, i32, i32) {
    %c0_i32 = arith.constant 0 : i32
    %c0_i32_0 = arith.constant 0 : i32
    return %arg0, %arg1, %c0_i32 : i32, i32, i32
  }
  func.func @transform_5(%arg0: i32, %arg1: i32) -> (i32, i32) {
    %c0_i32 = arith.constant 0 : i32
    %c0_i32_0 = arith.constant 0 : i32
    return %arg1, %c0_i32 : i32, i32
  }
  func.func @transform_6(%arg0: i32, %arg1: i32) -> (i32, i32, i32) {
    %c0_i32 = arith.constant 0 : i32
    %c0_i32_0 = arith.constant 0 : i32
    return %arg0, %arg1, %c0_i32 : i32, i32, i32
  }
}

</mosaic_0001>

<llo_original>
// kernel: tpu_custom_call.1
$region0: #{tpu_custom_call.1}
  #allocation0 [shape = 'u32[]', space=smem, size = 0x4, offset = 0x4, fixed_abs, tag = 'smem constant byte address 0x4 - core index']
  #allocation1 [shape = 'u32[144,128]{1,0:T(1,128)}', space=vmem, size = 0x12000, scoped, tag = 'internal scratch']
  %s0 = inlined_call_operand.hbm [shape: f32[2,8,128], index: 0, kind: input, shape index: {}]
  %s1 = inlined_call_operand.hbm [shape: f32[2,8,128], index: 1, kind: input, shape index: {}]
  %s2 = inlined_call_operand.hbm [shape: f32[2,8,128], index: 2, kind: input, shape index: {}]
  %s3 = inlined_call_operand.hbm [shape: f32[2,8,128], index: 3, kind: input, shape index: {}]
  %s4 = inlined_call_operand.hbm [shape: f32[2,8,128], index: 4, kind: input, shape index: {}]
  %s5 = inlined_call_operand.vmem [shape: f32[8,128], index: 5, kind: input, shape index: {}]
  %s6 = inlined_call_operand.hbm [shape: f32[2,8,128], index: 6, kind: output, shape index: {}]
  %s7 = sld [smem:[#allocation0]]
  $region77: #{tpu_custom_call.1} parent=0
    _
  %s9 = ssub.s32 1, %s7
  %s10 = scalar_select 0, %s9, %s7
  $region1: #{tpu_custom_call.1} parent=0
    #allocation2 [shape = 'u8[8192]{0}', space=vmem, size = 0x2000, scoped, tag = 'input window, operand 0']
    #allocation3 [shape = 's32[2]{0}', space=sflag, size = 0x8, scoped, tag = 'scoped memory for tpu_custom_call.1']
    #allocation4 [shape = 's32[2]{0}', space=sflag, size = 0x8, scoped, tag = 'scoped memory for tpu_custom_call.1']
    #allocation5 [shape = 'u8[8192]{0}', space=vmem, size = 0x2000, scoped, tag = 'input window, operand 1']
    #allocation6 [shape = 's32[2]{0}', space=sflag, size = 0x8, scoped, tag = 'scoped memory for tpu_custom_call.1']
    #allocation7 [shape = 'u8[8192]{0}', space=vmem, size = 0x2000, scoped, tag = 'input window, operand 2']
    #allocation8 [shape = 'u8[8192]{0}', space=vmem, size = 0x2000, scoped, tag = 'input window, operand 3']
    #allocation9 [shape = 's32[2]{0}', space=sflag, size = 0x8, scoped, tag = 'scoped memory for tpu_custom_call.1']
    #allocation10 [shape = 'u8[8192]{0}', space=vmem, size = 0x2000, scoped, tag = 'input window, operand 4']
    #allocation11 [shape = 'u8[8192]{0}', space=vmem, size = 0x2000, scoped, tag = 'output window, operand 0']
    %11 = vsyncpa [#allocation3], 0
    %s12 = scalar_lea.sflag [#allocation3], 1
    %13 = vsyncpa %s12, 0
    %14 = vsyncpa [#allocation6], 0
    %s15 = scalar_lea.sflag [#allocation6], 1
    %16 = vsyncpa %s15, 0
    %17 = vsyncpa [#allocation9], 0
    %s18 = scalar_lea.sflag [#allocation9], 1
    %19 = vsyncpa %s18, 0
    %20 = vsyncpa [#allocation4], 0
    %s21 = scalar_lea.sflag [#allocation4], 1
    %22 = vsyncpa %s21, 0
    loop: start=0, step=1, limit=4
    $region2: #{tpu_custom_call.1} parent=1 // loop_pre_header
      _
    $region3: #{tpu_custom_call.1} parent=1 // loop_header
      %s24 = sphi 0, %s28
      %p25 = scmp.ge.s32.totalorder %s24, 4
      %s31 = sphi 0, %s43
      %s32 = sphi 0, %s39
      %s33 = sphi 0, %s31
      %s34 = sphi 0, %s32
      %s35 = sphi 0, %s33
      %s36 = sphi 0, %s34
      %s48 = sphi 0, %s50
      %s51 = sphi 0, %s48
      %s52 = sphi 0, %s51
      %s68 = sphi 0, %s52
      %s76 = sphi 0, %s78
      %s79 = sphi 0, %s76
      %s80 = sphi 0, %s79
      %s96 = sphi 0, %s80
      %s104 = sphi 0, %s106
      %s107 = sphi 0, %s104
      %s108 = sphi 0, %s107
      %s124 = sphi 0, %s108
      %s132 = sphi 0, %s134
      %s135 = sphi 0, %s132
      %s136 = sphi 0, %s135
      %s152 = sphi 0, %s136
      %s160 = sphi 0, %s162
      %s163 = sphi 0, %s160
      %s164 = sphi 0, %s163
      %s180 = sphi 0, %s164
      %s186 = sphi 0, %s188
      %s189 = sphi 0, %s186
      %s190 = sphi 0, %s189
      %s206 = sphi 0, %s190
      %s214 = sphi 0, %s216
      %s217 = sphi 0, %s214
      %s218 = sphi 0, %s217
      %s234 = sphi 0, %s218
    $region4: #{tpu_custom_call.1} parent=1 // loop_header_branch
      %27 = sbr.rel (%p25) target = $region8
    $region5: #{tpu_custom_call.1} parent=1 // loop_body
      %s29 = ssub.s32 %s24, 1
      %s30 = ssub.s32 %s24, 2
      %s37 = sadd.s32 1, %s32
      %p38 = scmp.ge.s32.totalorder %s37, 1
      %s39 = scalar_select %p38, 0, %s37
      %s40 = sadd.s32 1, %s31
      %s41 = scalar_select %p38, %s40, %s31
      %p42 = scmp.ge.s32.totalorder %s41, 2
      %s43 = scalar_select %p42, 0, %s41
      %s44 = ssub.s32 %s31, %s43
      %s45 = ssub.s32 %s32, %s39
      %s46 = sor.u32 %s44, %s45
      %p47 = scmp.eq.s32.totalorder %s46, 0
      %s49 = sadd.s32 %s48, 1
      %s50 = scalar_select %p47, %s48, %s49
      %p53 = pneg %p47
      %p54 = scmp.eq.s32.totalorder %s24, 1
      %p55 = por %p53, %p54
      %p56 = scmp.ne.s32.totalorder %s48, %s51
      %p57 = scmp.eq.s32.totalorder %s24, 0
      %p58 = por %p56, %p57
      %p59 = scmp.ne.s32.totalorder %s48, %s51
      %p60 = scmp.eq.s32.totalorder %s29, 1
      %p61 = por %p59, %p60
      %p62 = scmp.ne.s32.totalorder %s51, %s52
      %p63 = scmp.eq.s32.totalorder %s29, 0
      %p64 = por %p62, %p63
      %p65 = scmp.ne.s32.totalorder %s51, %s52
      %p66 = scmp.eq.s32.totalorder %s30, 1
      %p67 = por %p65, %p66
      %p69 = scmp.ne.s32.totalorder %s52, %s68
      %p70 = scmp.eq.s32.totalorder %s30, 0
      %p71 = por %p69, %p70
      %s72 = ssub.s32 %s31, %s43
      %s73 = ssub.s32 %s32, %s39
      %s74 = sor.u32 %s72, %s73
      %p75 = scmp.eq.s32.totalorder %s74, 0
      %s77 = sadd.s32 %s76, 1
      %s78 = scalar_select %p75, %s76, %s77
      %p81 = pneg %p75
      %p82 = scmp.eq.s32.totalorder %s24, 1
      %p83 = por %p81, %p82
      %p84 = scmp.ne.s32.totalorder %s76, %s79
      %p85 = scmp.eq.s32.totalorder %s24, 0
      %p86 = por %p84, %p85
      %p87 = scmp.ne.s32.totalorder %s76, %s79
      %p88 = scmp.eq.s32.totalorder %s29, 1
      %p89 = por %p87, %p88
      %p90 = scmp.ne.s32.totalorder %s79, %s80
      %p91 = scmp.eq.s32.totalorder %s29, 0
      %p92 = por %p90, %p91
      %p93 = scmp.ne.s32.totalorder %s79, %s80
      %p94 = scmp.eq.s32.totalorder %s30, 1
      %p95 = por %p93, %p94
      %p97 = scmp.ne.s32.totalorder %s80, %s96
      %p98 = scmp.eq.s32.totalorder %s30, 0
      %p99 = por %p97, %p98
      %s100 = ssub.s32 %s31, %s43
      %s101 = ssub.s32 %s32, %s39
      %s102 = sor.u32 %s100, %s101
      %p103 = scmp.eq.s32.totalorder %s102, 0
      %s105 = sadd.s32 %s104, 1
      %s106 = scalar_select %p103, %s104, %s105
      %p109 = pneg %p103
      %p110 = scmp.eq.s32.totalorder %s24, 1
      %p111 = por %p109, %p110
      %p112 = scmp.ne.s32.totalorder %s104, %s107
      %p113 = scmp.eq.s32.totalorder %s24, 0
      %p114 = por %p112, %p113
      %p115 = scmp.ne.s32.totalorder %s104, %s107
      %p116 = scmp.eq.s32.totalorder %s29, 1
      %p117 = por %p115, %p116
      %p118 = scmp.ne.s32.totalorder %s107, %s108
      %p119 = scmp.eq.s32.totalorder %s29, 0
      %p120 = por %p118, %p119
      %p121 = scmp.ne.s32.totalorder %s107, %s108
      %p122 = scmp.eq.s32.totalorder %s30, 1
      %p123 = por %p121, %p122
      %p125 = scmp.ne.s32.totalorder %s108, %s124
      %p126 = scmp.eq.s32.totalorder %s30, 0
      %p127 = por %p125, %p126
      %s128 = ssub.s32 %s31, %s43
      %s129 = ssub.s32 %s32, %s39
      %s130 = sor.u32 %s128, %s129
      %p131 = scmp.eq.s32.totalorder %s130, 0
      %s133 = sadd.s32 %s132, 1
      %s134 = scalar_select %p131, %s132, %s133
      %p137 = pneg %p131
      %p138 = scmp.eq.s32.totalorder %s24, 1
      %p139 = por %p137, %p138
      %p140 = scmp.ne.s32.totalorder %s132, %s135
      %p141 = scmp.eq.s32.totalorder %s24, 0
      %p142 = por %p140, %p141
      %p143 = scmp.ne.s32.totalorder %s132, %s135
      %p144 = scmp.eq.s32.totalorder %s29, 1
      %p145 = por %p143, %p144
      %p146 = scmp.ne.s32.totalorder %s135, %s136
      %p147 = scmp.eq.s32.totalorder %s29, 0
      %p148 = por %p146, %p147
      %p149 = scmp.ne.s32.totalorder %s135, %s136
      %p150 = scmp.eq.s32.totalorder %s30, 1
      %p151 = por %p149, %p150
      %p153 = scmp.ne.s32.totalorder %s136, %s152
      %p154 = scmp.eq.s32.totalorder %s30, 0
      %p155 = por %p153, %p154
      %s156 = ssub.s32 %s31, %s43
      %s157 = ssub.s32 %s32, %s39
      %s158 = sor.u32 %s156, %s157
      %p159 = scmp.eq.s32.totalorder %s158, 0
      %s161 = sadd.s32 %s160, 1
      %s162 = scalar_select %p159, %s160, %s161
      %p165 = pneg %p159
      %p166 = scmp.eq.s32.totalorder %s24, 1
      %p167 = por %p165, %p166
      %p168 = scmp.ne.s32.totalorder %s160, %s163
      %p169 = scmp.eq.s32.totalorder %s24, 0
      %p170 = por %p168, %p169
      %p171 = scmp.ne.s32.totalorder %s160, %s163
      %p172 = scmp.eq.s32.totalorder %s29, 1
      %p173 = por %p171, %p172
      %p174 = scmp.ne.s32.totalorder %s163, %s164
      %p175 = scmp.eq.s32.totalorder %s29, 0
      %p176 = por %p174, %p175
      %p177 = scmp.ne.s32.totalorder %s163, %s164
      %p178 = scmp.eq.s32.totalorder %s30, 1
      %p179 = por %p177, %p178
      %p181 = scmp.ne.s32.totalorder %s164, %s180
      %p182 = scmp.eq.s32.totalorder %s30, 0
      %p183 = por %p181, %p182
      %s184 = ssub.s32 %s32, %s39
      %p185 = scmp.eq.s32.totalorder %s184, 0
      %s187 = sadd.s32 %s186, 1
      %s188 = scalar_select %p185, %s186, %s187
      %p191 = pneg %p185
      %p192 = scmp.eq.s32.totalorder %s24, 1
      %p193 = por %p191, %p192
      %p194 = scmp.ne.s32.totalorder %s186, %s189
      %p195 = scmp.eq.s32.totalorder %s24, 0
      %p196 = por %p194, %p195
      %p197 = scmp.ne.s32.totalorder %s186, %s189
      %p198 = scmp.eq.s32.totalorder %s29, 1
      %p199 = por %p197, %p198
      %p200 = scmp.ne.s32.totalorder %s189, %s190
      %p201 = scmp.eq.s32.totalorder %s29, 0
      %p202 = por %p200, %p201
      %p203 = scmp.ne.s32.totalorder %s189, %s190
      %p204 = scmp.eq.s32.totalorder %s30, 1
      %p205 = por %p203, %p204
      %p207 = scmp.ne.s32.totalorder %s190, %s206
      %p208 = scmp.eq.s32.totalorder %s30, 0
      %p209 = por %p207, %p208
      %s210 = ssub.s32 %s31, %s43
      %s211 = ssub.s32 %s32, %s39
      %s212 = sor.u32 %s210, %s211
      %p213 = scmp.eq.s32.totalorder %s212, 0
      %s215 = sadd.s32 %s214, 1
      %s216 = scalar_select %p213, %s214, %s215
      %p219 = pneg %p213
      %p220 = scmp.eq.s32.totalorder %s24, 1
      %p221 = por %p219, %p220
      %p222 = scmp.ne.s32.totalorder %s214, %s217
      %p223 = scmp.eq.s32.totalorder %s24, 0
      %p224 = por %p222, %p223
      %p225 = scmp.ne.s32.totalorder %s214, %s217
      %p226 = scmp.eq.s32.totalorder %s29, 1
      %p227 = por %p225, %p226
      %p228 = scmp.ne.s32.totalorder %s217, %s218
      %p229 = scmp.eq.s32.totalorder %s29, 0
      %p230 = por %p228, %p229
      %p231 = scmp.ne.s32.totalorder %s217, %s218
      %p232 = scmp.eq.s32.totalorder %s30, 1
      %p233 = por %p231, %p232
      %p235 = scmp.ne.s32.totalorder %s218, %s234
      %p236 = scmp.eq.s32.totalorder %s30, 0
      %p237 = por %p235, %p236
      %p238 = scmp.le.s32.totalorder 1, %s24
      %p239 = scmp.lt.s32.totalorder %s24, 3
      %p240 = pnand %p238, %p239
      %p241 = pneg %p240
      // Predicated region
      $region9: #{tpu_custom_call.1} parent=5 // pred_check
        _
      $region10: #{tpu_custom_call.1} parent=5 // pred_check_branch
        %243 = sbr.rel (%p240) target = $region12
      $region11: #{tpu_custom_call.1} parent=5 // pred_region
        %s244 = ssub.s32 %s24, 1
        // Predicated region
        $region13: #{tpu_custom_call.1} parent=11 // pred_check
          %p245 = pneg %p202
        $region14: #{tpu_custom_call.1} parent=11 // pred_check_branch
          %247 = sbr.rel (%p245) target = $region16
        $region15: #{tpu_custom_call.1} parent=11 // pred_region
          %p248 = scmp.lt.s32.totalorder %s34, 0
          %s249 = scalar_select %p248, %s34, 0
          %s250 = smul.addr %s249, 8
          %s251 = scalar_lea.vmem %s5, %s250
        $region16: #{tpu_custom_call.1} parent=11 // pred_fallthru
          _
      $region12: #{tpu_custom_call.1} parent=5 // pred_fallthru
        _
      %p252 = scmp.lt.s32.totalorder %s24, 2
      // Predicated region
      $region17: #{tpu_custom_call.1} parent=5 // pred_check
        %p253 = pneg %p252
      $region18: #{tpu_custom_call.1} parent=5 // pred_check_branch
        %255 = sbr.rel (%p253) target = $region20
      $region19: #{tpu_custom_call.1} parent=5 // pred_region
        // Predicated region
        $region21: #{tpu_custom_call.1} parent=19 // pred_check
          %p256 = pneg %p58
        $region22: #{tpu_custom_call.1} parent=19 // pred_check_branch
          %258 = sbr.rel (%p256) target = $region24
        $region23: #{tpu_custom_call.1} parent=19 // pred_region
          %s259 = sand.u32 %s48, 1
          %s260 = scalar_lea.sflag [#allocation3], %s259
          %s261 = sand.u32 %s48, 1
          %s262 = smul.addr %s261, 8
          %s263 = scalar_lea.vmem [#allocation2], %s262
          %s265 = ssub.s32 128, 128
          %266 = vsyncadd %s260, %s265
          %s267 = sadd.s32 %s32, %s31
          %s268 = smul.addr %s267, 128
          %s269 = scalar_lea.hbm %s0, %s268
          %s271 = sshll.u32 %s263, 4
          %s272 = int_to_ptr.vmem [resolvable:$true] %s271
          %274 = dma.hbm_to_vmem [thread:$0]  %s269, 128, %s272, %s260
        $region24: #{tpu_custom_call.1} parent=19 // pred_fallthru
          _
        // Predicated region
        $region25: #{tpu_custom_call.1} parent=19 // pred_check
          %p275 = pneg %p86
        $region26: #{tpu_custom_call.1} parent=19 // pred_check_branch
          %277 = sbr.rel (%p275) target = $region28
        $region27: #{tpu_custom_call.1} parent=19 // pred_region
          %s278 = sand.u32 %s24, 1
          %s279 = scalar_lea.sflag [#allocation6], %s278
          %s280 = sand.u32 %s76, 1
          %s281 = smul.addr %s280, 8
          %s282 = scalar_lea.vmem [#allocation5], %s281
          %s284 = ssub.s32 128, 128
          %285 = vsyncadd %s279, %s284
          %s286 = sadd.s32 %s32, %s31
          %s287 = smul.addr %s286, 128
          %s288 = scalar_lea.hbm %s1, %s287
          %s290 = sshll.u32 %s282, 4
          %s291 = int_to_ptr.vmem [resolvable:$true] %s290
          %293 = dma.hbm_to_vmem [thread:$0]  %s288, 128, %s291, %s279
        $region28: #{tpu_custom_call.1} parent=19 // pred_fallthru
          _
        // Predicated region
        $region29: #{tpu_custom_call.1} parent=19 // pred_check
          %p294 = pneg %p114
        $region30: #{tpu_custom_call.1} parent=19 // pred_check_branch
          %296 = sbr.rel (%p294) target = $region32
        $region31: #{tpu_custom_call.1} parent=19 // pred_region
          %s297 = sand.u32 %s24, 1
          %s298 = scalar_lea.sflag [#allocation6], %s297
          %s299 = sand.u32 %s104, 1
          %s300 = smul.addr %s299, 8
          %s301 = scalar_lea.vmem [#allocation7], %s300
          %s303 = ssub.s32 128, 128
          %304 = vsyncadd %s298, %s303
          %s305 = sadd.s32 %s32, %s31
          %s306 = smul.addr %s305, 128
          %s307 = scalar_lea.hbm %s2, %s306
          %s309 = sshll.u32 %s301, 4
          %s310 = int_to_ptr.vmem [resolvable:$true] %s309
          %312 = dma.hbm_to_vmem [thread:$0]  %s307, 128, %s310, %s298
        $region32: #{tpu_custom_call.1} parent=19 // pred_fallthru
          _
        // Predicated region
        $region33: #{tpu_custom_call.1} parent=19 // pred_check
          %p313 = pneg %p142
        $region34: #{tpu_custom_call.1} parent=19 // pred_check_branch
          %315 = sbr.rel (%p313) target = $region36
        $region35: #{tpu_custom_call.1} parent=19 // pred_region
          %s316 = sand.u32 %s24, 1
          %s317 = scalar_lea.sflag [#allocation9], %s316
          %s318 = sand.u32 %s132, 1
          %s319 = smul.addr %s318, 8
          %s320 = scalar_lea.vmem [#allocation8], %s319
          %s322 = ssub.s32 128, 128
          %323 = vsyncadd %s317, %s322
          %s324 = sadd.s32 %s32, %s31
          %s325 = smul.addr %s324, 128
          %s326 = scalar_lea.hbm %s3, %s325
          %s328 = sshll.u32 %s320, 4
          %s329 = int_to_ptr.vmem [resolvable:$true] %s328
          %331 = dma.hbm_to_vmem [thread:$0]  %s326, 128, %s329, %s317
        $region36: #{tpu_custom_call.1} parent=19 // pred_fallthru
          _
        // Predicated region
        $region37: #{tpu_custom_call.1} parent=19 // pred_check
          %p332 = pneg %p170
        $region38: #{tpu_custom_call.1} parent=19 // pred_check_branch
          %334 = sbr.rel (%p332) target = $region40
        $region39: #{tpu_custom_call.1} parent=19 // pred_region
          %s335 = sand.u32 %s24, 1
          %s336 = scalar_lea.sflag [#allocation9], %s335
          %s337 = sand.u32 %s160, 1
          %s338 = smul.addr %s337, 8
          %s339 = scalar_lea.vmem [#allocation10], %s338
          %s341 = ssub.s32 128, 128
          %342 = vsyncadd %s336, %s341
          %s343 = sadd.s32 %s32, %s31
          %s344 = smul.addr %s343, 128
          %s345 = scalar_lea.hbm %s4, %s344
          %s347 = sshll.u32 %s339, 4
          %s348 = int_to_ptr.vmem [resolvable:$true] %s347
          %350 = dma.hbm_to_vmem [thread:$0]  %s345, 128, %s348, %s336
        $region40: #{tpu_custom_call.1} parent=19 // pred_fallthru
          _
      $region20: #{tpu_custom_call.1} parent=5 // pred_fallthru
        _
      %p351 = scmp.le.s32.totalorder 1, %s24
      %p352 = scmp.lt.s32.totalorder %s24, 3
      %p353 = pnand %p351, %p352
      %p354 = pneg %p353
      // Predicated region
      $region41: #{tpu_custom_call.1} parent=5 // pred_check
        _
      $region42: #{tpu_custom_call.1} parent=5 // pred_check_branch
        %356 = sbr.rel (%p353) target = $region44
      $region43: #{tpu_custom_call.1} parent=5 // pred_region
        %s357 = ssub.s32 %s24, 1
        %s358 = sand.u32 %s51, 1
        %s359 = scalar_lea.sflag [#allocation3], %s358
        %s360 = sand.u32 %s51, 1
        %s361 = smul.addr %s360, 8
        %s362 = scalar_lea.vmem [#allocation2], %s361
        // Predicated region
        $region45: #{tpu_custom_call.1} parent=43 // pred_check
          %p363 = pneg %p64
        $region46: #{tpu_custom_call.1} parent=43 // pred_check_branch
          %365 = sbr.rel (%p363) target = $region48
        $region47: #{tpu_custom_call.1} parent=43 // pred_region
          %366 = dma.done %s359, 128
        $region48: #{tpu_custom_call.1} parent=43 // pred_fallthru
          _
        %s367 = sand.u32 %s29, 1
        %s368 = scalar_lea.sflag [#allocation6], %s367
        %s369 = sand.u32 %s79, 1
        %s370 = smul.addr %s369, 8
        %s371 = scalar_lea.vmem [#allocation5], %s370
        // Predicated region
        $region49: #{tpu_custom_call.1} parent=43 // pred_check
          %p372 = pneg %p92
        $region50: #{tpu_custom_call.1} parent=43 // pred_check_branch
          %374 = sbr.rel (%p372) target = $region52
        $region51: #{tpu_custom_call.1} parent=43 // pred_region
          %375 = dma.done %s368, 128
        $region52: #{tpu_custom_call.1} parent=43 // pred_fallthru
          _
        %s376 = sand.u32 %s29, 1
        %s377 = scalar_lea.sflag [#allocation6], %s376
        %s378 = sand.u32 %s107, 1
        %s379 = smul.addr %s378, 8
        %s380 = scalar_lea.vmem [#allocation7], %s379
        // Predicated region
        $region53: #{tpu_custom_call.1} parent=43 // pred_check
          %p381 = pneg %p120
        $region54: #{tpu_custom_call.1} parent=43 // pred_check_branch
          %383 = sbr.rel (%p381) target = $region56
        $region55: #{tpu_custom_call.1} parent=43 // pred_region
          %384 = dma.done %s377, 128
        $region56: #{tpu_custom_call.1} parent=43 // pred_fallthru
          _
        %s385 = sand.u32 %s29, 1
        %s386 = scalar_lea.sflag [#allocation9], %s385
        %s387 = sand.u32 %s135, 1
        %s388 = smul.addr %s387, 8
        %s389 = scalar_lea.vmem [#allocation8], %s388
        // Predicated region
        $region57: #{tpu_custom_call.1} parent=43 // pred_check
          %p390 = pneg %p148
        $region58: #{tpu_custom_call.1} parent=43 // pred_check_branch
          %392 = sbr.rel (%p390) target = $region60
        $region59: #{tpu_custom_call.1} parent=43 // pred_region
          %393 = dma.done %s386, 128
        $region60: #{tpu_custom_call.1} parent=43 // pred_fallthru
          _
        %s394 = sand.u32 %s29, 1
        %s395 = scalar_lea.sflag [#allocation9], %s394
        %s396 = sand.u32 %s163, 1
        %s397 = smul.addr %s396, 8
        %s398 = scalar_lea.vmem [#allocation10], %s397
        // Predicated region
        $region61: #{tpu_custom_call.1} parent=43 // pred_check
          %p399 = pneg %p176
        $region62: #{tpu_custom_call.1} parent=43 // pred_check_branch
          %401 = sbr.rel (%p399) target = $region64
        $region63: #{tpu_custom_call.1} parent=43 // pred_region
          %402 = dma.done %s395, 128
        $region64: #{tpu_custom_call.1} parent=43 // pred_fallthru
          _
        %s403 = sand.u32 %s51, 1
        %s404 = scalar_lea.sflag [#allocation3], %s403
        %s405 = sand.u32 %s51, 1
        %s406 = smul.addr %s405, 8
        %s407 = scalar_lea.vmem [#allocation2], %s406
        %p408 = pneg %p64
        %p409 = pneg %p61
        %s410 = sand.u32 %s29, 1
        %s411 = scalar_lea.sflag [#allocation6], %s410
        %s412 = sand.u32 %s79, 1
        %s413 = smul.addr %s412, 8
        %s414 = scalar_lea.vmem [#allocation5], %s413
        %p415 = pneg %p92
        %p416 = pneg %p89
        %s417 = sand.u32 %s29, 1
        %s418 = scalar_lea.sflag [#allocation6], %s417
        %s419 = sand.u32 %s107, 1
        %s420 = smul.addr %s419, 8
        %s421 = scalar_lea.vmem [#allocation7], %s420
        %p422 = pneg %p120
        %p423 = pneg %p117
        %s424 = sand.u32 %s29, 1
        %s425 = scalar_lea.sflag [#allocation9], %s424
        %s426 = sand.u32 %s135, 1
        %s427 = smul.addr %s426, 8
        %s428 = scalar_lea.vmem [#allocation8], %s427
        %p429 = pneg %p148
        %p430 = pneg %p145
        %s431 = sand.u32 %s29, 1
        %s432 = scalar_lea.sflag [#allocation9], %s431
        %s433 = sand.u32 %s163, 1
        %s434 = smul.addr %s433, 8
        %s435 = scalar_lea.vmem [#allocation10], %s434
        %p436 = pneg %p176
        %p437 = pneg %p173
        %p438 = scmp.lt.s32.totalorder %s34, 0
        %s439 = scalar_select %p438, %s34, 0
        %s440 = smul.addr %s439, 8
        %s441 = scalar_lea.vmem %s5, %s440
        %p442 = pneg %p202
        %p443 = pneg %p199
        %p444 = pneg %p230
        %p445 = pneg %p227
        %s446 = sand.u32 %s217, 1
        %s447 = scalar_lea.sflag [#allocation4], %s446
        %s448 = sand.u32 %s217, 1
        %s449 = smul.addr %s448, 8
        %s450 = scalar_lea.vmem [#allocation11], %s449
        %p451 = scmp.lt.s32.totalorder %s34, 0
        %s452 = scalar_select %p451, %s34, 0
        %s453 = smul.addr %s452, 8
        %s454 = scalar_lea.vmem %s5, %s453
        %v455 = vld [vmem:[%s362] sm:$0xff]
        %v456 = vld [vmem:[%s371] sm:$0xff]
        %v457 = vadd.f32 %v455, %v456
        %v458 = vld [vmem:[%s380] sm:$0xff]
        %v459 = vadd.f32 %v457, %v458
        %v460 = vld [vmem:[%s389] sm:$0xff]
        %v461 = vadd.f32 %v459, %v460
        %v462 = vld [vmem:[%s398] sm:$0xff]
        %v463 = vadd.f32 %v461, %v462
        %v464 = vmul.f32 %v463, 11.313708
        %v465 = vld [vmem:[%s454] sm:$0xff]
        %v466 = vadd.f32 %v464, %v465
        %467 = vst [vmem:[%s450] sm:$0xff] %v466
        %s468 = sand.u32 %s217, 1
        %s469 = scalar_lea.sflag [#allocation4], %s468
        %s470 = sand.u32 %s217, 1
        %s471 = smul.addr %s470, 8
        %s472 = scalar_lea.vmem [#allocation11], %s471
        // Predicated region
        $region65: #{tpu_custom_call.1} parent=43 // pred_check
          %p473 = pneg %p227
        $region66: #{tpu_custom_call.1} parent=43 // pred_check_branch
          %475 = sbr.rel (%p473) target = $region68
        $region67: #{tpu_custom_call.1} parent=43 // pred_region
          %s477 = ssub.s32 128, 128
          %478 = vsyncadd %s469, %s477
          %s479 = sadd.s32 %s34, %s33
          %s480 = smul.addr %s479, 128
          %s481 = scalar_lea.hbm %s6, %s480
          %s483 = sshll.u32 %s472, 4
          %s484 = int_to_ptr.vmem [resolvable:$true] %s483
          %486 = dma.vmem_to_hbm [thread:$0]  %s484, 128, %s481, %s469
        $region68: #{tpu_custom_call.1} parent=43 // pred_fallthru
          _
      $region44: #{tpu_custom_call.1} parent=5 // pred_fallthru
        _
      %p487 = scmp.le.s32.totalorder 2, %s24
      // Predicated region
      $region69: #{tpu_custom_call.1} parent=5 // pred_check
        %p488 = pneg %p487
      $region70: #{tpu_custom_call.1} parent=5 // pred_check_branch
        %490 = sbr.rel (%p488) target = $region72
      $region71: #{tpu_custom_call.1} parent=5 // pred_region
        %s491 = ssub.s32 %s24, 2
        // Predicated region
        $region73: #{tpu_custom_call.1} parent=71 // pred_check
          %p492 = pneg %p233
        $region74: #{tpu_custom_call.1} parent=71 // pred_check_branch
          %494 = sbr.rel (%p492) target = $region76
        $region75: #{tpu_custom_call.1} parent=71 // pred_region
          %s495 = sand.u32 %s218, 1
          %s496 = scalar_lea.sflag [#allocation4], %s495
          %s497 = sand.u32 %s218, 1
          %s498 = smul.addr %s497, 8
          %s499 = scalar_lea.vmem [#allocation11], %s498
          %500 = dma.done %s496, 128
        $region76: #{tpu_custom_call.1} parent=71 // pred_fallthru
          _
      $region72: #{tpu_custom_call.1} parent=5 // pred_fallthru
        _
    $region6: #{tpu_custom_call.1} parent=1 // loop_footer
      %s28 = sadd.s32 1, %s24
    $region7: #{tpu_custom_call.1} parent=1 // loop_footer_branch
      %23 = sbr.rel target = $region3
    $region8: #{tpu_custom_call.1} parent=1 // loop_exit
      _
    %501 = vsyncpa [#allocation3], 1
    %s502 = scalar_lea.sflag [#allocation3], 1
    %503 = vsyncpa %s502, 1
    %504 = vsyncpa [#allocation6], 1
    %s505 = scalar_lea.sflag [#allocation6], 1
    %506 = vsyncpa %s505, 1
    %507 = vsyncpa [#allocation9], 1
    %s508 = scalar_lea.sflag [#allocation9], 1
    %509 = vsyncpa %s508, 1
    %510 = vsyncpa [#allocation4], 1
    %s511 = scalar_lea.sflag [#allocation4], 1
    %512 = vsyncpa %s511, 1

</llo_original>
